<compile_context>
chip_gen: v7x
topology: tpu7x:2x2x1
jax: 0.10.0
libtpu: 0.0.40
codegen_flags: <defaults>
</compile_context>

<pallas_src>
import functools

import jax
import jax.numpy as jnp
from jax.experimental import pallas as pl
from jax.experimental.pallas import tpu as pltpu


def _gate_kernel(xr_ref, xi_ref, wt_ref, b_ref, o_ref):
    # xr/xi: (tm, C, F) float32 planes of the complex spectrum tile.
    xr = xr_ref[...]
    xi = xi_ref[...]

    # |Xf| then mean over the channel axis -> (tm, F).
    mag = jnp.mean(jnp.sqrt(xr * xr + xi * xi), axis=1)

    # Single lane-dense MXU matmul: (tm, F) @ (F, E_pad), f32 accumulation.
    logits = jnp.dot(mag, wt_ref[...], preferred_element_type=jnp.float32)
    logits = logits + b_ref[...]          # padded lanes carry -1e30 bias

    # Numerically-stable softmax over the (padded) expert lanes.
    m = jnp.max(logits, axis=-1, keepdims=True)
    e = jnp.exp(logits - m)               # exp(-1e30 - m) underflows to 0 on pads
    s = jnp.sum(e, axis=-1, keepdims=True)
    o_ref[...] = (e * pl.reciprocal(s)).astype(o_ref.dtype)


@functools.partial(jax.jit, static_argnames=("tm",))
def gate_network(xf, W, b, *, tm=256):
    """xf: complex64 (B, C, freq_bins). W: (num_experts, freq_bins). b: (num_experts,).

    Returns float32 (B, num_experts) softmax gate weights.
    """
    B, C, F = xf.shape
    E = W.shape[0]

    # Split complex input into f32 planes (Pallas TPU refs are real-typed).
    x_re = jnp.real(xf).astype(jnp.float32)
    x_im = jnp.imag(xf).astype(jnp.float32)

    # Lane-dense expert axis: pad E up to a multiple of 128.
    # Zero weight columns + -1e30 bias => softmax assigns ~0 mass to pads.
    E_pad = pl.cdiv(E, 128) * 128
    wt = jnp.zeros((F, E_pad), jnp.float32).at[:, :E].set(W.T.astype(jnp.float32))
    bias = jnp.full((1, E_pad), -1e30, jnp.float32).at[:, :E].set(
        b.astype(jnp.float32))

    # Row tile over the batch: big tiles for real workloads, exact fit for tiny B.
    if B <= tm:
        tm_eff = B                      # single grid step; full-dim block is legal
    else:
        tm_eff = max(8, (tm // 8) * 8)  # keep the 2-D output block 8-aligned

    B_pad = pl.cdiv(B, tm_eff) * tm_eff
    if B_pad != B:
        pad = ((0, B_pad - B), (0, 0), (0, 0))
        x_re = jnp.pad(x_re, pad)
        x_im = jnp.pad(x_im, pad)

    grid = (B_pad // tm_eff,)

    x_spec = pl.BlockSpec((tm_eff, C, F), lambda i: (i, 0, 0))
    w_spec = pl.BlockSpec((F, E_pad), lambda i: (0, 0))
    b_spec = pl.BlockSpec((1, E_pad), lambda i: (0, 0))
    o_spec = pl.BlockSpec((tm_eff, E_pad), lambda i: (i, 0))

    out = pl.pallas_call(
        _gate_kernel,
        out_shape=jax.ShapeDtypeStruct((B_pad, E_pad), jnp.float32),
        grid_spec=pltpu.PrefetchScalarGridSpec(
            num_scalar_prefetch=0,
            grid=grid,
            in_specs=[x_spec, x_spec, w_spec, b_spec],
            out_specs=o_spec,
        ),
        compiler_params=pltpu.CompilerParams(
            dimension_semantics=("parallel",)),
    )(x_re, x_im, wt, bias)

    return out[:B, :E]


if __name__ == "__main__":
    key = jax.random.PRNGKey(0)
    k1, k2, k3, k4 = jax.random.split(key, 4)

    B, C = 2, 4
    freq_bins, num_experts = 16, 4

    # Deterministic parameters (nn.Linear(freq_bins, num_experts) layout).
    W = (1.0 / jnp.sqrt(freq_bins)) * jax.random.normal(
        k1, (num_experts, freq_bins), jnp.float32)
    b = 0.1 * jax.random.normal(k2, (num_experts,), jnp.float32)

    # Complex spectrum input Xf: (B, C, freq_bins).
    x_re = jax.random.normal(k3, (B, C, freq_bins), jnp.float32)
    x_im = jax.random.normal(k4, (B, C, freq_bins), jnp.float32)
    xf = jax.lax.complex(x_re, x_im)

    out = gate_network(xf, W, b)
    out = jax.block_until_ready(out)

    # Pure-JAX reference of the PyTorch forward.
    mag_ref = jnp.mean(jnp.abs(xf), axis=1)            # (B, F)
    logits_ref = mag_ref @ W.T + b                      # (B, E)
    ref = jax.nn.softmax(logits_ref, axis=-1)

    assert out.shape == (B, num_experts)
    assert out.dtype == jnp.float32
    assert jnp.allclose(out, ref, atol=1e-5, rtol=1e-4)
    assert jnp.allclose(jnp.sum(out, axis=-1), 1.0, atol=1e-5)

    print("KERNEL_OK")
</pallas_src>

<mosaic_0001>
module attributes {stable_mosaic.version = 11 : i64} {
  func.func @_gate_kernel(%arg0: i32, %arg1: memref<2x4x16xf32, #tpu.memory_space<vmem>>, %arg2: memref<2x4x16xf32, #tpu.memory_space<vmem>>, %arg3: memref<16x128xf32, #tpu.memory_space<vmem>>, %arg4: memref<1x128xf32, #tpu.memory_space<vmem>>, %arg5: memref<2x128xf32, #tpu.memory_space<vmem>>) attributes {dimension_semantics = [#tpu.dimension_semantics<parallel>], iteration_bounds = array<i64: 1>, scalar_prefetch = 0 : i64, scratch_operands = 0 : i64, tpu.core_type = #tpu.core_type<tc>, window_params = [{transform_indices = @transform_0, window_bounds = array<i64: 2, 4, 16>}, {transform_indices = @transform_1, window_bounds = array<i64: 2, 4, 16>}, {pipeline_mode = #tpu.pipeline_mode<synchronous>, transform_indices = @transform_2, window_bounds = array<i64: 16, 128>}, {pipeline_mode = #tpu.pipeline_mode<synchronous>, transform_indices = @transform_3, window_bounds = array<i64: 1, 128>}, {transform_indices = @transform_4, window_bounds = array<i64: 2, 128>}]} {
    %c0 = arith.constant 0 : index
    %c0_0 = arith.constant 0 : index
    %c0_1 = arith.constant 0 : index
    %0 = vector.load %arg1[%c0, %c0_0, %c0_1] : memref<2x4x16xf32, #tpu.memory_space<vmem>>, vector<2x4x16xf32>
    %c0_2 = arith.constant 0 : index
    %c0_3 = arith.constant 0 : index
    %c0_4 = arith.constant 0 : index
    %1 = vector.load %arg2[%c0_2, %c0_3, %c0_4] : memref<2x4x16xf32, #tpu.memory_space<vmem>>, vector<2x4x16xf32>
    %2 = arith.mulf %0, %0 : vector<2x4x16xf32>
    %3 = arith.mulf %1, %1 : vector<2x4x16xf32>
    %4 = arith.addf %2, %3 : vector<2x4x16xf32>
    %5 = math.sqrt %4 : vector<2x4x16xf32>
    %cst = arith.constant dense<0.000000e+00> : vector<2x16xf32>
    %6 = vector.multi_reduction <add>, %5, %cst [1] : vector<2x4x16xf32> to vector<2x16xf32>
    %cst_5 = arith.constant 4.000000e+00 : f32
    %7 = vector.broadcast %cst_5 : f32 to vector<2x16xf32>
    %8 = arith.divf %6, %7 : vector<2x16xf32>
    %c0_6 = arith.constant 0 : index
    %c0_7 = arith.constant 0 : index
    %9 = vector.load %arg3[%c0_6, %c0_7] : memref<16x128xf32, #tpu.memory_space<vmem>>, vector<16x128xf32>
    %cst_8 = arith.constant dense<0.000000e+00> : vector<2x128xf32>
    %10 = tpu.matmul %8, %9, %cst_8 {dimension_numbers = #tpu.dot_dimension_numbers<[1], [0], [0], [1], [0, 0, 1, 1], [], []>} : vector<2x16xf32>, vector<16x128xf32>, vector<2x128xf32> -> vector<2x128xf32>
    %c0_9 = arith.constant 0 : index
    %c0_10 = arith.constant 0 : index
    %11 = vector.load %arg4[%c0_9, %c0_10] : memref<1x128xf32, #tpu.memory_space<vmem>>, vector<1x128xf32>
    %12 = vector.broadcast %11 : vector<1x128xf32> to vector<2x128xf32>
    %13 = arith.addf %10, %12 : vector<2x128xf32>
    %cst_11 = arith.constant dense<0xFF800000> : vector<2xf32>
    %14 = vector.multi_reduction <maximumf>, %13, %cst_11 [1] : vector<2x128xf32> to vector<2xf32>
    %15 = vector.shape_cast %14 : vector<2xf32> to vector<2x1xf32>
    %16 = vector.broadcast %15 : vector<2x1xf32> to vector<2x128xf32>
    %17 = arith.subf %13, %16 : vector<2x128xf32>
    %18 = math.exp %17 : vector<2x128xf32>
    %cst_12 = arith.constant dense<0.000000e+00> : vector<2xf32>
    %19 = vector.multi_reduction <add>, %18, %cst_12 [1] : vector<2x128xf32> to vector<2xf32>
    %20 = vector.shape_cast %19 : vector<2xf32> to vector<2x1xf32>
    %21 = tpu.reciprocal %20 : vector<2x1xf32> -> vector<2x1xf32>
    %22 = vector.broadcast %21 : vector<2x1xf32> to vector<2x128xf32>
    %23 = arith.mulf %18, %22 : vector<2x128xf32>
    %c0_13 = arith.constant 0 : index
    %c0_14 = arith.constant 0 : index
    %24 = vector.load %arg5[%c0_13, %c0_14] : memref<2x128xf32, #tpu.memory_space<vmem>>, vector<2x128xf32>
    tpu.vector_store %arg5[%c0_13, %c0_14], %23 {strides = array<i32>} : memref<2x128xf32, #tpu.memory_space<vmem>>, vector<2x128xf32>,
    return
  }
  func.func @transform_0(%arg0: i32) -> (i32, i32, i32) {
    %c0_i32 = arith.constant 0 : i32
    %c0_i32_0 = arith.constant 0 : i32
    %c0_i32_1 = arith.constant 0 : i32
    return %arg0, %c0_i32, %c0_i32_0 : i32, i32, i32
  }
  func.func @transform_1(%arg0: i32) -> (i32, i32, i32) {
    %c0_i32 = arith.constant 0 : i32
    %c0_i32_0 = arith.constant 0 : i32
    %c0_i32_1 = arith.constant 0 : i32
    return %arg0, %c0_i32, %c0_i32_0 : i32, i32, i32
  }
  func.func @transform_2(%arg0: i32) -> (i32, i32) {
    %c0_i32 = arith.constant 0 : i32
    %c0_i32_0 = arith.constant 0 : i32
    %c0_i32_1 = arith.constant 0 : i32
    return %c0_i32, %c0_i32_0 : i32, i32
  }
  func.func @transform_3(%arg0: i32) -> (i32, i32) {
    %c0_i32 = arith.constant 0 : i32
    %c0_i32_0 = arith.constant 0 : i32
    %c0_i32_1 = arith.constant 0 : i32
    return %c0_i32, %c0_i32_0 : i32, i32
  }
  func.func @transform_4(%arg0: i32) -> (i32, i32) {
    %c0_i32 = arith.constant 0 : i32
    %c0_i32_0 = arith.constant 0 : i32
    return %arg0, %c0_i32 : i32, i32
  }
}

</mosaic_0001>

<llo_original>
// kernel: custom-call
$region0: #{custom-call}
  %s0 = inlined_call_operand.hbm [shape: c64[2,4,16], index: 0, kind: input, shape index: {}]
  %s1 = inlined_call_operand.vmem [shape: f32[2,4,16], index: 1, kind: output, shape index: {}]
  $region1: #{custom-call} parent=0
    #allocation0 [shape = 's32[1]{0}', space=sflag, size = 0x4, scoped, tag = 'scoped memory for custom-call']
    %2 = vsyncpa [#allocation0], 0
    %s3 = sshll.u32 %s1, 4
    %s4 = int_to_ptr.vmem [resolvable:$true] %s3
    %6 = dma.hbm_to_vmem [thread:$0]  %s0, 128, %s4, [#allocation0]
    %7 = dma.done [#allocation0], 128
    %8 = vsyncpa [#allocation0], 1

// kernel: custom-call.1
$region0: #{custom-call.1}
  %s0 = inlined_call_operand.hbm [shape: c64[2,4,16], index: 0, kind: input, shape index: {}]
  %s1 = inlined_call_operand.vmem [shape: f32[2,4,16], index: 1, kind: output, shape index: {}]
  %s2 = scalar_lea.hbm %s0, 128
  $region1: #{custom-call.1} parent=0
    #allocation0 [shape = 's32[1]{0}', space=sflag, size = 0x4, scoped, tag = 'scoped memory for custom-call.1']
    %3 = vsyncpa [#allocation0], 0
    %s4 = sshll.u32 %s1, 4
    %s5 = int_to_ptr.vmem [resolvable:$true] %s4
    %7 = dma.hbm_to_vmem [thread:$0]  %s2, 128, %s5, [#allocation0]
    %8 = dma.done [#allocation0], 128
    %9 = vsyncpa [#allocation0], 1

// kernel: gate_network.1
$region0: #{gate_network.1}
  #allocation0 [shape = 'u32[]', space=smem, size = 0x4, offset = 0x4, fixed_abs, tag = 'smem constant byte address 0x4 - core index']
  #allocation1 [shape = 'u32[144,128]{1,0:T(1,128)}', space=vmem, size = 0x12000, scoped, tag = 'internal scratch']
  %s0 = inlined_call_operand.vmem [shape: f32[2,4,16], index: 0, kind: input, shape index: {}]
  %s1 = inlined_call_operand.vmem [shape: f32[2,4,16], index: 1, kind: input, shape index: {}]
  %s2 = inlined_call_operand.vmem [shape: f32[16,128], index: 2, kind: input, shape index: {}]
  %s3 = inlined_call_operand.vmem [shape: f32[1,128], index: 3, kind: input, shape index: {}]
  %s4 = inlined_call_operand.hbm [shape: f32[2,128], index: 4, kind: output, shape index: {}]
  %s5 = sld [smem:[#allocation0]]
  $region26: #{gate_network.1} parent=0
    _
  %s7 = ssub.s32 1, %s5
  %s8 = scalar_select 0, %s7, %s5
  $region1: #{gate_network.1} parent=0
    #allocation2 [shape = 'u8[1024]{0}', space=vmem, size = 0x400, scoped, tag = 'output window, operand 0, single buffered']
    #allocation3 [shape = 's32[1]{0}', space=sflag, size = 0x4, scoped, tag = 'scoped memory for gate_network.1']
    %9 = vsyncpa [#allocation3], 0
    // Predicated region
    $region2: #{gate_network.1} parent=1 // pred_check
      _
    $region3: #{gate_network.1} parent=1 // pred_check_branch
      %11 = sbr.rel (0) target = $region5
    $region4: #{gate_network.1} parent=1 // pred_region
      _
    $region5: #{gate_network.1} parent=1 // pred_fallthru
      _
    // Predicated region
    $region6: #{gate_network.1} parent=1 // pred_check
      _
    $region7: #{gate_network.1} parent=1 // pred_check_branch
      %13 = sbr.rel (0) target = $region9
    $region8: #{gate_network.1} parent=1 // pred_region
      _
    $region9: #{gate_network.1} parent=1 // pred_fallthru
      _
    // Predicated region
    $region10: #{gate_network.1} parent=1 // pred_check
      _
    $region11: #{gate_network.1} parent=1 // pred_check_branch
      %15 = sbr.rel (0) target = $region13
    $region12: #{gate_network.1} parent=1 // pred_region
      _
    $region13: #{gate_network.1} parent=1 // pred_fallthru
      _
    // Predicated region
    $region14: #{gate_network.1} parent=1 // pred_check
      _
    $region15: #{gate_network.1} parent=1 // pred_check_branch
      %17 = sbr.rel (0) target = $region17
    $region16: #{gate_network.1} parent=1 // pred_region
      _
    $region17: #{gate_network.1} parent=1 // pred_fallthru
      _
    %v18 = vld [vmem:[%s0] sm:$0xf]
    %v19 = vld [vmem:[%s0 + $0x4] sm:$0xf]
    %v20 = vld [vmem:[%s1] sm:$0xf]
    %v21 = vld [vmem:[%s1 + $0x4] sm:$0xf]
    %v22 = vmul.f32 %v18, %v18
    %v23 = vmul.f32 %v19, %v19
    %v24 = vmul.f32 %v20, %v20
    %v25 = vmul.f32 %v21, %v21
    %v26 = vadd.f32 %v22, %v24
    %v27 = vadd.f32 %v23, %v25
    %v28 = vrsqrt.pop %v26
    %v29 = vmul.f32 %v26, %v28
    %vm30 = vcmp.eq.f32.partialorder %v26, inf
    %v31 = vsel %vm30, %v26, %v29
    %vm32 = vcmp.eq.f32.partialorder %v26, 0.0
    %v33 = vand.u32 %v26, 2147483648
    %v34 = vsel %vm32, %v33, %v31
    %v35 = vrsqrt.pop %v27
    %v36 = vmul.f32 %v27, %v35
    %vm37 = vcmp.eq.f32.partialorder %v27, inf
    %v38 = vsel %vm37, %v27, %v36
    %vm39 = vcmp.eq.f32.partialorder %v27, 0.0
    %v40 = vand.u32 %v27, 2147483648
    %v41 = vsel %vm39, %v40, %v38
    %vm42 = vcmask 125952
    %v43 = vsel %vm42, %v34, 0.0
    %v44 = vrot.slane %v43, 4
    %v45 = vadd.f32 %v43, %v44
    %v46 = vrot.slane %v45, 2
    %v47 = vadd.f32 %v45, %v46
    %v48 = vrot.slane %v47, 1
    %v49 = vadd.f32 %v47, %v48
    %v50 = vsel %vm42, %v41, 0.0
    %v51 = vrot.slane %v50, 4
    %v52 = vadd.f32 %v50, %v51
    %v53 = vrot.slane %v52, 2
    %v54 = vadd.f32 %v52, %v53
    %v55 = vrot.slane %v54, 1
    %v56 = vadd.f32 %v54, %v55
    %v57 = vrcp.pop 4.0
    %v58 = vmul.f32 %v49, %v57
    %v59 = vmul.f32 %v56, %v57
    %v60 = vld [vmem:[%s2] sm:$0xff]
    %v61 = vld [vmem:[%s2 + $0x8] sm:$0xff]
    %v62 = vld [vmem:[%s3] sm:$0x1]
    %v64 = vlaneseq
    %v65 = vshrl.u32 %v64, 7
    %v66 = vsub.s32 0, %v65
    %v67 = vrot.slane %v62, %v66
    %vm71 = vcmask 1041409
    %v72 = vsel %vm71, %v59, %v58
    %vm73 = vcmask 130048
    %v74 = vsel %vm73, %v72, 0
    %76 = vmatprep.subr.mxu0 0.0
    %77 = vmatpush1.msra.mxu0 %v60
    %78 = vmatprep.subr.mxu0 0.0
    %79 = vmatpush1.msra.mxu0 %v61
    %80 = vmatprep.subr.mxu0 0.0
    %81 = vmatpush1.msra.mxu0 0.0
    %82 = vmatprep.subr.mxu0 0.0
    %83 = vmatpush1.msra.mxu0 0.0
    %84 = vmatprep.subr.mxu0 0.0
    %85 = vmatpush1.msra.mxu0 0.0
    %86 = vmatprep.subr.mxu0 0.0
    %87 = vmatpush1.msra.mxu0 0.0
    %88 = vmatprep.subr.mxu0 0.0
    %89 = vmatpush1.msra.mxu0 0.0
    %90 = vmatprep.subr.mxu0 0.0
    %91 = vmatpush1.msra.mxu0 0.0
    %92 = vmatprep.subr.mxu0 0.0
    %93 = vmatpush1.msra.mxu0 0.0
    %94 = vmatprep.subr.mxu0 0.0
    %95 = vmatpush1.msra.mxu0 0.0
    %96 = vmatprep.subr.mxu0 0.0
    %97 = vmatpush1.msra.mxu0 0.0
    %98 = vmatprep.subr.mxu0 0.0
    %99 = vmatpush1.msra.mxu0 0.0
    %100 = vmatprep.subr.mxu0 0.0
    %101 = vmatpush1.msra.mxu0 0.0
    %102 = vmatprep.subr.mxu0 0.0
    %103 = vmatpush1.msra.mxu0 0.0
    %104 = vmatprep.subr.mxu0 0.0
    %105 = vmatpush1.msra.mxu0 0.0
    %106 = vmatprep.subr.mxu0 0.0
    %107 = vmatpush1.msra.mxu0 0.0
    %108 = vmatprep.subr.mxu0 0.0
    %109 = vmatpush1.msra.mxu0 0.0
    %110 = vmatprep.subr.mxu0 0.0
    %111 = vmatpush1.msra.mxu0 0.0
    %112 = vmatprep.subr.mxu0 0.0
    %113 = vmatpush1.msra.mxu0 0.0
    %114 = vmatprep.subr.mxu0 0.0
    %115 = vmatpush1.msra.mxu0 0.0
    %116 = vmatprep.subr.mxu0 0.0
    %117 = vmatpush1.msra.mxu0 0.0
    %118 = vmatprep.subr.mxu0 0.0
    %119 = vmatpush1.msra.mxu0 0.0
    %120 = vmatprep.subr.mxu0 0.0
    %121 = vmatpush1.msra.mxu0 0.0
    %122 = vmatprep.subr.mxu0 0.0
    %123 = vmatpush1.msra.mxu0 0.0
    %124 = vmatprep.subr.mxu0 0.0
    %125 = vmatpush1.msra.mxu0 0.0
    %126 = vmatprep.subr.mxu0 0.0
    %127 = vmatpush1.msra.mxu0 0.0
    %128 = vmatprep.subr.mxu0 0.0
    %129 = vmatpush1.msra.mxu0 0.0
    %130 = vmatprep.subr.mxu0 0.0
    %131 = vmatpush1.msra.mxu0 0.0
    %132 = vmatprep.subr.mxu0 0.0
    %133 = vmatpush1.msra.mxu0 0.0
    %134 = vmatprep.subr.mxu0 0.0
    %135 = vmatpush1.msra.mxu0 0.0
    %136 = vmatprep.subr.mxu0 0.0
    %137 = vmatpush1.msra.mxu0 0.0
    %138 = vmatprep.subr.mxu0 0.0
    %139 = vmatpush1.msra.mxu0 0.0
    %140 = vmatprep.mubr.f32.mxu0 0.0
    %141 = vmatmul.mubr.f32.gmra.mrb[0].mxu0 %v74
    %v142 = vpop.f32.mrb[0].mxu0
    %v143 = vadd.f32 %v67, %v142
    %v144 = vpop.f32.mrb[0].mxu0
    %145 = vdwg.mxu0
    %vm146 = vcmask 1041408
    %v147 = vsel %vm146, %v143, -inf
    %148 = vmax.xlane.f32.xlu0 %v147
    %v149 = vpop.xlane.xlu0 %148
    %v150 = vsub.f32 %v143, %v149
    %v151 = vmul.f32 %v150, 1.442695
    %v152 = vpow.pop %v151
    %v153 = vsel %vm146, %v152, 0.0
    %154 = vadd.xlane.f32.xlu0 %v153
    %v155 = vpop.xlane.xlu0 %154
    %v156 = vrcp.pop %v155
    %v157 = vmul.f32 %v152, %v156
    %158 = vst [vmem:[#allocation2] sm:$0x3] %v157
    // Predicated region
    $region18: #{gate_network.1} parent=1 // pred_check
      _
    $region19: #{gate_network.1} parent=1 // pred_check_branch
      %160 = sbr.rel (0) target = $region21
    $region20: #{gate_network.1} parent=1 // pred_region
      %s162 = ssub.s32 32, 32
      %163 = vsyncadd [#allocation3], %s162
      %s165 = sshll.u32 [#allocation2], 4
      %s166 = int_to_ptr.vmem [resolvable:$true] %s165
      %168 = dma.vmem_to_hbm [thread:$0]  %s166, 32, %s4, [#allocation3]
    $region21: #{gate_network.1} parent=1 // pred_fallthru
      _
    // Predicated region
    $region22: #{gate_network.1} parent=1 // pred_check
      _
    $region23: #{gate_network.1} parent=1 // pred_check_branch
      %170 = sbr.rel (0) target = $region25
    $region24: #{gate_network.1} parent=1 // pred_region
      %171 = dma.done [#allocation3], 32
    $region25: #{gate_network.1} parent=1 // pred_fallthru
      _
    %172 = vsyncpa [#allocation3], 1

</llo_original>
